<compile_context>
chip_gen: v6e
topology: v6e:2x2x1
jax: 0.10.0
libtpu: 0.0.40
codegen_flags: <defaults>
</compile_context>

<pallas_src>
import functools
import math

import jax
import jax.numpy as jnp
from jax.experimental import pallas as pl
from jax.experimental.pallas import tpu as pltpu


def _proj_kernel(x_ref, w_ref, a12_ref, whb_ref, wh1_ref, wh2t_ref):
    """One-time projection: Wh = x @ W and the two attention-vector terms.

    x_ref   : [N, F_in]
    w_ref   : [F_in, F_out]
    a12_ref : [F_out, 128]   packed attention vectors (col 0 = a1, col 1 = a2)
    whb_ref : [N, F_out]     bf16 Wh (resident rhs for the attention matmul)
    wh1_ref : [N, 1]         f32  Wh @ a1  (query-side term, column)
    wh2t_ref: [1, N]         f32  (Wh @ a2)^T  (key-side term, lane-dense row)
    """
    x = x_ref[...].astype(jnp.bfloat16)
    w = w_ref[...].astype(jnp.bfloat16)
    wh = jnp.dot(x, w, preferred_element_type=jnp.float32)          # [N, F_out]
    wh_b = wh.astype(jnp.bfloat16)
    whb_ref[...] = wh_b

    # Fused attention-vector matmul: one lane-dense MXU push (cols 0/1 carry
    # a1/a2, the rest is zero padding) — done once for the whole layer.
    a12 = a12_ref[...].astype(jnp.bfloat16)                         # [F_out, 128]
    wh12 = jnp.dot(wh_b, a12, preferred_element_type=jnp.float32)   # [N, 128]

    wh1_ref[...] = wh12[:, 0:1]                                     # [N, 1]
    # One lane-dense transpose (once), then a static row slice.
    wh2t_ref[...] = wh12.T[1:2, :]                                  # [1, N]


def _attn_kernel(adj_ref, wh1_ref, wh2t_ref, whb_ref, out_ref, *, alpha, concat):
    """Per-tile masked softmax + one MXU matmul.

    adj_ref : [tile_q, N]   int8 edge mask (streamed, Buffered(3))
    wh1_ref : [tile_q, 1]   query-side term for this row tile
    wh2t_ref: [1, N]        key-side term (resident)
    whb_ref : [N, F_out]    bf16 Wh (resident)
    out_ref : [tile_q, F_out]
    """
    # e = leakyrelu(Wh a1 + (Wh a2)^T) — broadcast add, VPU has slack.
    e = wh1_ref[...] + wh2t_ref[...]                                # [tile_q, N]
    e = jnp.where(e > 0.0, e, alpha * e)

    # Mask non-edges with a scalar fill (matches the -9e15 in the reference).
    att = jnp.where(adj_ref[...] != 0, e, -9e15)

    # Row softmax over keys; EUP (approx) reciprocal for the denominator.
    m = jnp.max(att, axis=1, keepdims=True)
    p = jnp.exp(att - m)
    denom = jnp.sum(p, axis=1, keepdims=True)
    att = p * pl.reciprocal(denom, approx=True)

    # TODO(synk): F.dropout on the attention weights is identity in eval mode;
    # training-mode dropout (pltpu.prng_*) is intentionally omitted.

    # h' = attention @ Wh (bf16 MXU operands, f32 accumulation).
    h = jnp.dot(att.astype(jnp.bfloat16), whb_ref[...],
                preferred_element_type=jnp.float32)                 # [tile_q, F_out]

    if concat:
        # ELU (alpha=1.0, PyTorch default); expm1 for precision near 0.
        h = jnp.where(h > 0.0, h, jnp.expm1(h))

    out_ref[...] = h.astype(out_ref.dtype)


def _pick_tile_q(n):
    # Prefer >= 4 grid steps (>= 2 per TensorCore on v7x, so double-buffering
    # overlaps adj DMA with compute) with the largest MXU-friendly tile that
    # allows it, capped at 256 rows for v7x's 64 MiB VMEM.  Fall back to the
    # largest divisor, then to the whole array for tiny graphs.
    for t in (256, 128, 64, 32, 16, 8):
        if n % t == 0 and n // t >= 4:
            return t
    for t in (256, 128, 64, 32, 16, 8):
        if n % t == 0:
            return t
    return n


def gat_layer(x, adj, weight, attention, *, alpha, concat=True, tile_q=None):
    """Pallas GAT layer forward.  x:[N,F_in], adj:[N,N], weight:[F_in,F_out],
    attention:[2*F_out, 1].  Returns [N, F_out] float32."""
    n, f_in = x.shape
    f_out = weight.shape[1]

    x32 = x.astype(jnp.float32)
    w32 = weight.astype(jnp.float32)

    # Pack a1 || a2 into one lane-dense [F_out, 128] rhs (cols 0 and 1; rest 0).
    a12 = jnp.zeros((f_out, 128), jnp.float32)
    a12 = a12.at[:, 0:1].set(attention[:f_out, :].astype(jnp.float32))
    a12 = a12.at[:, 1:2].set(attention[f_out:, :].astype(jnp.float32))

    # --- kernel 1: one-time projection (hoisted out of the row-tile grid) ---
    whb, wh1, wh2t = pl.pallas_call(
        _proj_kernel,
        out_shape=(
            jax.ShapeDtypeStruct((n, f_out), jnp.bfloat16),
            jax.ShapeDtypeStruct((n, 1), jnp.float32),
            jax.ShapeDtypeStruct((1, n), jnp.float32),
        ),
        grid=(1,),
        in_specs=[
            pl.BlockSpec((n, f_in), lambda i: (0, 0)),
            pl.BlockSpec((f_in, f_out), lambda i: (0, 0)),
            pl.BlockSpec((f_out, 128), lambda i: (0, 0)),
        ],
        out_specs=(
            pl.BlockSpec((n, f_out), lambda i: (0, 0)),
            pl.BlockSpec((n, 1), lambda i: (0, 0)),
            pl.BlockSpec((1, n), lambda i: (0, 0)),
        ),
    )(x32, w32, a12)

    # Adjacency as an int8 mask (only adj > 0 is consumed by the layer).
    # TODO(synk): bit-pack to 1 bit/edge (uint32 lanes) for large graphs and
    # expand in-kernel on the VPU; N^2 int8 streaming is fine at demo scale.
    adj_mask = (adj > 0).astype(jnp.int8)

    if tile_q is None:
        tile_q = _pick_tile_q(n)
    assert n % tile_q == 0, "tile_q must divide N"
    grid = (n // tile_q,)

    # Real per-step VMEM footprint: resident Wh (bf16) + wh2 row, 3 adj buffers,
    # double-buffered wh1 and output tiles.  Only request a larger scoped VMEM
    # limit when the default budget would be exceeded (matters on v5e).
    footprint = (
        n * f_out * 2                 # resident Wh (bf16)
        + n * 4                       # wh2^T row (f32)
        + 3 * tile_q * n              # adj int8, Buffered(3)
        + 2 * tile_q * 4              # wh1 tiles (double-buffered)
        + 2 * tile_q * f_out * 4      # output tiles (double-buffered)
    )
    vmem_limit = None
    if footprint > (12 << 20):
        vmem_limit = min(int(footprint * 3 // 2) + (4 << 20), 100 << 20)

    kernel = functools.partial(_attn_kernel, alpha=float(alpha), concat=concat)

    # --- kernel 2: row-tiled masked softmax + att @ Wh ---
    return pl.pallas_call(
        kernel,
        out_shape=jax.ShapeDtypeStruct((n, f_out), jnp.float32),
        grid=grid,
        in_specs=[
            pl.BlockSpec((tile_q, n), lambda i: (i, 0),
                         pipeline_mode=pl.Buffered(3)),   # streamed adj tile
            pl.BlockSpec((tile_q, 1), lambda i: (i, 0)),  # wh1 tile
            pl.BlockSpec((1, n), lambda i: (0, 0)),       # wh2^T (resident)
            pl.BlockSpec((n, f_out), lambda i: (0, 0)),   # Wh bf16 (resident)
        ],
        out_specs=pl.BlockSpec((tile_q, f_out), lambda i: (i, 0)),
        compiler_params=pltpu.CompilerParams(
            dimension_semantics=("parallel",),
            vmem_limit_bytes=vmem_limit,
        ),
    )(adj_mask, wh1, wh2t, whb)


def _xavier_uniform(key, shape, gain):
    fan_in, fan_out = shape[0], shape[1]
    bound = gain * math.sqrt(6.0 / (fan_in + fan_out))
    return jax.random.uniform(key, shape, jnp.float32, -bound, bound)


def _reference(x, adj, weight, attention, alpha, concat=True):
    f_out = weight.shape[1]
    wh = x @ weight
    wh1 = wh @ attention[:f_out, :]
    wh2 = wh @ attention[f_out:, :]
    e = wh1 + wh2.T
    e = jnp.where(e > 0, e, alpha * e)
    att = jnp.where(adj > 0, e, jnp.full_like(e, -9e15))
    att = jax.nn.softmax(att, axis=1)
    h = att @ wh
    return jax.nn.elu(h) if concat else h


if __name__ == "__main__":
    N, F_IN, F_OUT = 256, 64, 128   # F_out = 128 -> lane-dense output stores
    ALPHA = 0.2                     # LeakyReLU negative slope
    DROPOUT = 0.5                   # unused (eval mode -> identity)

    key = jax.random.PRNGKey(0)
    k_x, k_adj, k_w, k_a = jax.random.split(key, 4)

    x = jax.random.normal(k_x, (N, F_IN), jnp.float32)
    # random sparse-ish adjacency with self loops
    adj = (jax.random.uniform(k_adj, (N, N)) < 0.2).astype(jnp.float32)
    adj = jnp.maximum(adj, jnp.eye(N, dtype=jnp.float32))

    # Deterministic xavier_uniform(gain=1.414) init (matches reset_parameters shapes)
    weight = _xavier_uniform(k_w, (F_IN, F_OUT), gain=1.414)
    attention = _xavier_uniform(k_a, (2 * F_OUT, 1), gain=1.414)

    out = gat_layer(x, adj, weight, attention, alpha=ALPHA, concat=True)
    out = jax.block_until_ready(out)

    ref = _reference(x, adj, weight, attention, ALPHA, concat=True)
    assert out.shape == (N, F_OUT)
    # Tolerance accounts for bf16 MXU operands (f32 accumulation) and the approx
    # EUP reciprocal in the softmax; the reference is full f32.
    assert jnp.allclose(out, ref, atol=5e-2, rtol=5e-2), "mismatch vs JAX reference"

    print("KERNEL_OK")
</pallas_src>

<mosaic_0001>
module attributes {stable_mosaic.version = 11 : i64} {
  func.func @_proj_kernel(%arg0: i32, %arg1: memref<256x64xf32, #tpu.memory_space<vmem>>, %arg2: memref<64x128xf32, #tpu.memory_space<vmem>>, %arg3: memref<128x128xf32, #tpu.memory_space<vmem>>, %arg4: memref<256x128xbf16, #tpu.memory_space<vmem>>, %arg5: memref<256x1xf32, #tpu.memory_space<vmem>>, %arg6: memref<1x256xf32, #tpu.memory_space<vmem>>) attributes {dimension_semantics = [#tpu.dimension_semantics<arbitrary>], iteration_bounds = array<i64: 1>, scalar_prefetch = 0 : i64, scratch_operands = 0 : i64, tpu.core_type = #tpu.core_type<tc>, window_params = [{pipeline_mode = #tpu.pipeline_mode<synchronous>, transform_indices = @transform_0, window_bounds = array<i64: 256, 64>}, {pipeline_mode = #tpu.pipeline_mode<synchronous>, transform_indices = @transform_1, window_bounds = array<i64: 64, 128>}, {pipeline_mode = #tpu.pipeline_mode<synchronous>, transform_indices = @transform_2, window_bounds = array<i64: 128, 128>}, {pipeline_mode = #tpu.pipeline_mode<synchronous>, transform_indices = @transform_3, window_bounds = array<i64: 256, 128>}, {pipeline_mode = #tpu.pipeline_mode<synchronous>, transform_indices = @transform_4, window_bounds = array<i64: 256, 1>}, {pipeline_mode = #tpu.pipeline_mode<synchronous>, transform_indices = @transform_5, window_bounds = array<i64: 1, 256>}]} {
    %c0 = arith.constant 0 : index
    %c0_0 = arith.constant 0 : index
    %0 = vector.load %arg1[%c0, %c0_0] : memref<256x64xf32, #tpu.memory_space<vmem>>, vector<256x64xf32>
    %1 = arith.truncf %0 : vector<256x64xf32> to vector<256x64xbf16>
    %c0_1 = arith.constant 0 : index
    %c0_2 = arith.constant 0 : index
    %2 = vector.load %arg2[%c0_1, %c0_2] : memref<64x128xf32, #tpu.memory_space<vmem>>, vector<64x128xf32>
    %3 = arith.truncf %2 : vector<64x128xf32> to vector<64x128xbf16>
    %cst = arith.constant dense<0.000000e+00> : vector<256x128xf32>
    %4 = tpu.matmul %1, %3, %cst {dimension_numbers = #tpu.dot_dimension_numbers<[1], [0], [0], [1], [0, 0, 1, 1], [], []>} : vector<256x64xbf16>, vector<64x128xbf16>, vector<256x128xf32> -> vector<256x128xf32>
    %5 = arith.truncf %4 : vector<256x128xf32> to vector<256x128xbf16>
    %c0_3 = arith.constant 0 : index
    %c0_4 = arith.constant 0 : index
    %6 = vector.load %arg4[%c0_3, %c0_4] : memref<256x128xbf16, #tpu.memory_space<vmem>>, vector<256x128xbf16>
    tpu.vector_store %arg4[%c0_3, %c0_4], %5 {strides = array<i32>} : memref<256x128xbf16, #tpu.memory_space<vmem>>, vector<256x128xbf16>,
    %c0_5 = arith.constant 0 : index
    %c0_6 = arith.constant 0 : index
    %7 = vector.load %arg3[%c0_5, %c0_6] : memref<128x128xf32, #tpu.memory_space<vmem>>, vector<128x128xf32>
    %8 = arith.truncf %7 : vector<128x128xf32> to vector<128x128xbf16>
    %cst_7 = arith.constant dense<0.000000e+00> : vector<256x128xf32>
    %9 = tpu.matmul %5, %8, %cst_7 {dimension_numbers = #tpu.dot_dimension_numbers<[1], [0], [0], [1], [0, 0, 1, 1], [], []>} : vector<256x128xbf16>, vector<128x128xbf16>, vector<256x128xf32> -> vector<256x128xf32>
    %10 = vector.extract_strided_slice %9 {offsets = [0, 0], sizes = [256, 1], strides = [1, 1]} : vector<256x128xf32> to vector<256x1xf32>
    %c0_8 = arith.constant 0 : index
    %c0_9 = arith.constant 0 : index
    %11 = vector.load %arg5[%c0_8, %c0_9] : memref<256x1xf32, #tpu.memory_space<vmem>>, vector<256x1xf32>
    tpu.vector_store %arg5[%c0_8, %c0_9], %10 {strides = array<i32>} : memref<256x1xf32, #tpu.memory_space<vmem>>, vector<256x1xf32>,
    %12 = tpu.transpose %9, [1, 0] : vector<256x128xf32> -> vector<128x256xf32>
    %13 = vector.extract_strided_slice %12 {offsets = [1, 0], sizes = [1, 256], strides = [1, 1]} : vector<128x256xf32> to vector<1x256xf32>
    %c0_10 = arith.constant 0 : index
    %c0_11 = arith.constant 0 : index
    %14 = vector.load %arg6[%c0_10, %c0_11] : memref<1x256xf32, #tpu.memory_space<vmem>>, vector<1x256xf32>
    tpu.vector_store %arg6[%c0_10, %c0_11], %13 {strides = array<i32>} : memref<1x256xf32, #tpu.memory_space<vmem>>, vector<1x256xf32>,
    return
  }
  func.func @transform_0(%arg0: i32) -> (i32, i32) {
    %c0_i32 = arith.constant 0 : i32
    %c0_i32_0 = arith.constant 0 : i32
    %c0_i32_1 = arith.constant 0 : i32
    return %c0_i32, %c0_i32_0 : i32, i32
  }
  func.func @transform_1(%arg0: i32) -> (i32, i32) {
    %c0_i32 = arith.constant 0 : i32
    %c0_i32_0 = arith.constant 0 : i32
    %c0_i32_1 = arith.constant 0 : i32
    return %c0_i32, %c0_i32_0 : i32, i32
  }
  func.func @transform_2(%arg0: i32) -> (i32, i32) {
    %c0_i32 = arith.constant 0 : i32
    %c0_i32_0 = arith.constant 0 : i32
    %c0_i32_1 = arith.constant 0 : i32
    return %c0_i32, %c0_i32_0 : i32, i32
  }
  func.func @transform_3(%arg0: i32) -> (i32, i32) {
    %c0_i32 = arith.constant 0 : i32
    %c0_i32_0 = arith.constant 0 : i32
    %c0_i32_1 = arith.constant 0 : i32
    return %c0_i32, %c0_i32_0 : i32, i32
  }
  func.func @transform_4(%arg0: i32) -> (i32, i32) {
    %c0_i32 = arith.constant 0 : i32
    %c0_i32_0 = arith.constant 0 : i32
    %c0_i32_1 = arith.constant 0 : i32
    return %c0_i32, %c0_i32_0 : i32, i32
  }
  func.func @transform_5(%arg0: i32) -> (i32, i32) {
    %c0_i32 = arith.constant 0 : i32
    %c0_i32_0 = arith.constant 0 : i32
    %c0_i32_1 = arith.constant 0 : i32
    return %c0_i32, %c0_i32_0 : i32, i32
  }
}

</mosaic_0001>

<llo_original>
// kernel: tpu_custom_call.1
$region0: #{tpu_custom_call.1}
  #allocation0 [shape = 'u32[]', space=smem, size = 0x4, offset = 0x4, fixed_abs, tag = 'smem constant byte address 0x4 - core index']
  #allocation1 [shape = 'u32[144,128]{1,0:T(1,128)}', space=vmem, size = 0x12000, scoped, tag = 'internal scratch']
  %s0 = inlined_call_operand.vmem [shape: f32[256,64], index: 0, kind: input, shape index: {}]
  %s1 = inlined_call_operand.vmem [shape: f32[64,128], index: 1, kind: input, shape index: {}]
  %s2 = inlined_call_operand.vmem [shape: f32[128,128], index: 2, kind: input, shape index: {}]
  %s3 = inlined_call_operand.hbm [shape: bf16[256,128], index: 3, kind: output, shape index: {0}]
  %s4 = inlined_call_operand.vmem [shape: f32[256,1], index: 4, kind: output, shape index: {1}]
  %s5 = inlined_call_operand.hbm [shape: f32[1,256], index: 5, kind: output, shape index: {2}]
  %6 = xla_tuple %s3, %s4, %s5
  %s7 = sld [smem:[#allocation0]]
  $region38: #{tpu_custom_call.1} parent=0
    _
  %s9 = ssub.s32 1, %s7
  %s10 = scalar_select 0, %s9, %s7
  $region1: #{tpu_custom_call.1} parent=0
    #allocation2 [shape = 'u8[65536]{0}', space=vmem, size = 0x10000, scoped, tag = 'output window, operand 0, single buffered']
    #allocation3 [shape = 's32[1]{0}', space=sflag, size = 0x4, scoped, tag = 'scoped memory for tpu_custom_call.1']
    #allocation4 [shape = 'u8[1024]{0}', space=vmem, size = 0x400, scoped, tag = 'output window, operand 2, single buffered']
    #allocation5 [shape = 's32[1]{0}', space=sflag, size = 0x4, scoped, tag = 'scoped memory for tpu_custom_call.1']
    %11 = vsyncpa [#allocation3], 0
    %12 = vsyncpa [#allocation5], 0
    // Predicated region
    $region2: #{tpu_custom_call.1} parent=1 // pred_check
      _
    $region3: #{tpu_custom_call.1} parent=1 // pred_check_branch
      %14 = sbr.rel (0) target = $region5
    $region4: #{tpu_custom_call.1} parent=1 // pred_region
      _
    $region5: #{tpu_custom_call.1} parent=1 // pred_fallthru
      _
    // Predicated region
    $region6: #{tpu_custom_call.1} parent=1 // pred_check
      _
    $region7: #{tpu_custom_call.1} parent=1 // pred_check_branch
      %16 = sbr.rel (0) target = $region9
    $region8: #{tpu_custom_call.1} parent=1 // pred_region
      _
    $region9: #{tpu_custom_call.1} parent=1 // pred_fallthru
      _
    // Predicated region
    $region10: #{tpu_custom_call.1} parent=1 // pred_check
      _
    $region11: #{tpu_custom_call.1} parent=1 // pred_check_branch
      %18 = sbr.rel (0) target = $region13
    $region12: #{tpu_custom_call.1} parent=1 // pred_region
      _
    $region13: #{tpu_custom_call.1} parent=1 // pred_fallthru
      _
    %v20 = vld [vmem:[%s0] sm:$0xff]
    %v21 = vld [vmem:[%s0 + $0x8] sm:$0xff]
    %v22 = vld [vmem:[%s0 + $0x10] sm:$0xff]
    %v23 = vld [vmem:[%s0 + $0x18] sm:$0xff]
    %v24 = vld [vmem:[%s0 + $0x20] sm:$0xff]
    %v25 = vld [vmem:[%s0 + $0x28] sm:$0xff]
    %v26 = vld [vmem:[%s0 + $0x30] sm:$0xff]
    %v27 = vld [vmem:[%s0 + $0x38] sm:$0xff]
    %v28 = vld [vmem:[%s0 + $0x40] sm:$0xff]
    %v29 = vld [vmem:[%s0 + $0x48] sm:$0xff]
    %v30 = vld [vmem:[%s0 + $0x50] sm:$0xff]
    %v31 = vld [vmem:[%s0 + $0x58] sm:$0xff]
    %v32 = vld [vmem:[%s0 + $0x60] sm:$0xff]
    %v33 = vld [vmem:[%s0 + $0x68] sm:$0xff]
    %v34 = vld [vmem:[%s0 + $0x70] sm:$0xff]
    %v35 = vld [vmem:[%s0 + $0x78] sm:$0xff]
    %v36 = vld [vmem:[%s0 + $0x80] sm:$0xff]
    %v37 = vld [vmem:[%s0 + $0x88] sm:$0xff]
    %v38 = vld [vmem:[%s0 + $0x90] sm:$0xff]
    %v39 = vld [vmem:[%s0 + $0x98] sm:$0xff]
    %v40 = vld [vmem:[%s0 + $0xa0] sm:$0xff]
    %v41 = vld [vmem:[%s0 + $0xa8] sm:$0xff]
    %v42 = vld [vmem:[%s0 + $0xb0] sm:$0xff]
    %v43 = vld [vmem:[%s0 + $0xb8] sm:$0xff]
    %v44 = vld [vmem:[%s0 + $0xc0] sm:$0xff]
    %v45 = vld [vmem:[%s0 + $0xc8] sm:$0xff]
    %v46 = vld [vmem:[%s0 + $0xd0] sm:$0xff]
    %v47 = vld [vmem:[%s0 + $0xd8] sm:$0xff]
    %v48 = vld [vmem:[%s0 + $0xe0] sm:$0xff]
    %v49 = vld [vmem:[%s0 + $0xe8] sm:$0xff]
    %v50 = vld [vmem:[%s0 + $0xf0] sm:$0xff]
    %v51 = vld [vmem:[%s0 + $0xf8] sm:$0xff]
    %v52 = vpack.c.bf16 %v21, %v20
    %v53 = vpack.c.bf16 %v23, %v22
    %v54 = vpack.c.bf16 %v25, %v24
    %v55 = vpack.c.bf16 %v27, %v26
    %v56 = vpack.c.bf16 %v29, %v28
    %v57 = vpack.c.bf16 %v31, %v30
    %v58 = vpack.c.bf16 %v33, %v32
    %v59 = vpack.c.bf16 %v35, %v34
    %v60 = vpack.c.bf16 %v37, %v36
    %v61 = vpack.c.bf16 %v39, %v38
    %v62 = vpack.c.bf16 %v41, %v40
    %v63 = vpack.c.bf16 %v43, %v42
    %v64 = vpack.c.bf16 %v45, %v44
    %v65 = vpack.c.bf16 %v47, %v46
    %v66 = vpack.c.bf16 %v49, %v48
    %v67 = vpack.c.bf16 %v51, %v50
    %v68 = vld [vmem:[%s1] sm:$0xff]
    %v69 = vld [vmem:[%s1 + $0x8] sm:$0xff]
    %v70 = vld [vmem:[%s1 + $0x10] sm:$0xff]
    %v71 = vld [vmem:[%s1 + $0x18] sm:$0xff]
    %v72 = vld [vmem:[%s1 + $0x20] sm:$0xff]
    %v73 = vld [vmem:[%s1 + $0x28] sm:$0xff]
    %v74 = vld [vmem:[%s1 + $0x30] sm:$0xff]
    %v75 = vld [vmem:[%s1 + $0x38] sm:$0xff]
    %v76 = vpack.c.bf16 %v69, %v68
    %v77 = vpack.c.bf16 %v71, %v70
    %v78 = vpack.c.bf16 %v73, %v72
    %v79 = vpack.c.bf16 %v75, %v74
    %vm80 = vcmask 523264
    %v82 = vsel %vm80, %v52, 0
    %v85 = vsel %vm80, %v53, 0
    %v88 = vsel %vm80, %v54, 0
    %v91 = vsel %vm80, %v55, 0
    %v94 = vsel %vm80, %v56, 0
    %v97 = vsel %vm80, %v57, 0
    %v100 = vsel %vm80, %v58, 0
    %v103 = vsel %vm80, %v59, 0
    %v106 = vsel %vm80, %v60, 0
    %v109 = vsel %vm80, %v61, 0
    %v112 = vsel %vm80, %v62, 0
    %v115 = vsel %vm80, %v63, 0
    %v118 = vsel %vm80, %v64, 0
    %v121 = vsel %vm80, %v65, 0
    %v124 = vsel %vm80, %v66, 0
    %v127 = vsel %vm80, %v67, 0
    %129 = vmatprep.subr.bf16.mxu0 0
    %130 = vmatpush1.bf16.msra.mxu0 0
    %131 = vmatprep.subr.bf16.mxu0 0
    %132 = vmatpush1.bf16.msra.mxu0 0
    %133 = vmatprep.subr.bf16.mxu0 0
    %134 = vmatpush1.bf16.msra.mxu0 0
    %135 = vmatprep.subr.bf16.mxu0 0
    %136 = vmatpush1.bf16.msra.mxu0 0
    %137 = vmatprep.subr.bf16.mxu0 0
    %138 = vmatpush1.bf16.msra.mxu0 %v79
    %139 = vmatprep.subr.bf16.mxu0 0
    %140 = vmatpush1.bf16.msra.mxu0 %v78
    %141 = vmatprep.subr.bf16.mxu0 0
    %142 = vmatpush1.bf16.msra.mxu0 %v77
    %143 = vmatprep.subr.bf16.mxu0 0
    %144 = vmatpush1.bf16.msra.mxu0 %v76
    %145 = vmatprep.subr.bf16.mxu0 0
    %146 = vmatpush2.bf16.msra.mxu0 0
    %147 = vmatprep.subr.bf16.mxu0 0
    %148 = vmatpush2.bf16.msra.mxu0 0
    %149 = vmatprep.subr.bf16.mxu0 0
    %150 = vmatpush2.bf16.msra.mxu0 0
    %151 = vmatprep.subr.bf16.mxu0 0
    %152 = vmatpush2.bf16.msra.mxu0 0
    %153 = vmatprep.subr.bf16.mxu0 0
    %154 = vmatpush2.bf16.msra.mxu0 0
    %155 = vmatprep.subr.bf16.mxu0 0
    %156 = vmatpush2.bf16.msra.mxu0 0
    %157 = vmatprep.subr.bf16.mxu0 0
    %158 = vmatpush2.bf16.msra.mxu0 0
    %159 = vmatprep.subr.bf16.mxu0 0
    %160 = vmatpush2.bf16.msra.mxu0 0
    %161 = vmatprep.mubr.bf16.mxu0 0
    %162 = vmatmul.mubr.bf16.gmra.mxu0 %v82
    %v163 = vpop.f32.mrf.mxu0
    %v164 = vadd.f32 0.0, %v163
    %v165 = vpop.f32.mrf.mxu0
    %v166 = vpop.f32.mrf.mxu0
    %v167 = vadd.f32 0.0, %v166
    %v168 = vpop.f32.mrf.mxu0
    %169 = vmatprep.mubr.bf16.mxu0 0
    %170 = vmatmul.mubr.bf16.gmra.mxu0 %v85
    %v171 = vpop.f32.mrf.mxu0
    %v172 = vadd.f32 0.0, %v171
    %v173 = vpop.f32.mrf.mxu0
    %v174 = vpop.f32.mrf.mxu0
    %v175 = vadd.f32 0.0, %v174
    %v176 = vpop.f32.mrf.mxu0
    %177 = vmatprep.mubr.bf16.mxu0 0
    %178 = vmatmul.mubr.bf16.gmra.mxu0 %v88
    %v179 = vpop.f32.mrf.mxu0
    %v180 = vadd.f32 0.0, %v179
    %v181 = vpop.f32.mrf.mxu0
    %v182 = vpop.f32.mrf.mxu0
    %v183 = vadd.f32 0.0, %v182
    %v184 = vpop.f32.mrf.mxu0
    %185 = vmatprep.mubr.bf16.mxu0 0
    %186 = vmatmul.mubr.bf16.gmra.mxu0 %v91
    %v187 = vpop.f32.mrf.mxu0
    %v188 = vadd.f32 0.0, %v187
    %v189 = vpop.f32.mrf.mxu0
    %v190 = vpop.f32.mrf.mxu0
    %v191 = vadd.f32 0.0, %v190
    %v192 = vpop.f32.mrf.mxu0
    %193 = vmatprep.mubr.bf16.mxu0 0
    %194 = vmatmul.mubr.bf16.gmra.mxu0 %v94
    %v195 = vpop.f32.mrf.mxu0
    %v196 = vadd.f32 0.0, %v195
    %v197 = vpop.f32.mrf.mxu0
    %v198 = vpop.f32.mrf.mxu0
    %v199 = vadd.f32 0.0, %v198
    %v200 = vpop.f32.mrf.mxu0
    %201 = vmatprep.mubr.bf16.mxu0 0
    %202 = vmatmul.mubr.bf16.gmra.mxu0 %v97
    %v203 = vpop.f32.mrf.mxu0
    %v204 = vadd.f32 0.0, %v203
    %v205 = vpop.f32.mrf.mxu0
    %v206 = vpop.f32.mrf.mxu0
    %v207 = vadd.f32 0.0, %v206
    %v208 = vpop.f32.mrf.mxu0
    %209 = vmatprep.mubr.bf16.mxu0 0
    %210 = vmatmul.mubr.bf16.gmra.mxu0 %v100
    %v211 = vpop.f32.mrf.mxu0
    %v212 = vadd.f32 0.0, %v211
    %v213 = vpop.f32.mrf.mxu0
    %v214 = vpop.f32.mrf.mxu0
    %v215 = vadd.f32 0.0, %v214
    %v216 = vpop.f32.mrf.mxu0
    %217 = vmatprep.mubr.bf16.mxu0 0
    %218 = vmatmul.mubr.bf16.gmra.mxu0 %v103
    %v219 = vpop.f32.mrf.mxu0
    %v220 = vadd.f32 0.0, %v219
    %v221 = vpop.f32.mrf.mxu0
    %v222 = vpop.f32.mrf.mxu0
    %v223 = vadd.f32 0.0, %v222
    %v224 = vpop.f32.mrf.mxu0
    %225 = vmatprep.mubr.bf16.mxu0 0
    %226 = vmatmul.mubr.bf16.gmra.mxu0 %v106
    %v227 = vpop.f32.mrf.mxu0
    %v228 = vadd.f32 0.0, %v227
    %v229 = vpop.f32.mrf.mxu0
    %v230 = vpop.f32.mrf.mxu0
    %v231 = vadd.f32 0.0, %v230
    %v232 = vpop.f32.mrf.mxu0
    %233 = vmatprep.mubr.bf16.mxu0 0
    %234 = vmatmul.mubr.bf16.gmra.mxu0 %v109
    %v235 = vpop.f32.mrf.mxu0
    %v236 = vadd.f32 0.0, %v235
    %v237 = vpop.f32.mrf.mxu0
    %v238 = vpop.f32.mrf.mxu0
    %v239 = vadd.f32 0.0, %v238
    %v240 = vpop.f32.mrf.mxu0
    %241 = vmatprep.mubr.bf16.mxu0 0
    %242 = vmatmul.mubr.bf16.gmra.mxu0 %v112
    %v243 = vpop.f32.mrf.mxu0
    %v244 = vadd.f32 0.0, %v243
    %v245 = vpop.f32.mrf.mxu0
    %v246 = vpop.f32.mrf.mxu0
    %v247 = vadd.f32 0.0, %v246
    %v248 = vpop.f32.mrf.mxu0
    %249 = vmatprep.mubr.bf16.mxu0 0
    %250 = vmatmul.mubr.bf16.gmra.mxu0 %v115
    %v251 = vpop.f32.mrf.mxu0
    %v252 = vadd.f32 0.0, %v251
    %v253 = vpop.f32.mrf.mxu0
    %v254 = vpop.f32.mrf.mxu0
    %v255 = vadd.f32 0.0, %v254
    %v256 = vpop.f32.mrf.mxu0
    %257 = vmatprep.mubr.bf16.mxu0 0
    %258 = vmatmul.mubr.bf16.gmra.mxu0 %v118
    %v259 = vpop.f32.mrf.mxu0
    %v260 = vadd.f32 0.0, %v259
    %v261 = vpop.f32.mrf.mxu0
    %v262 = vpop.f32.mrf.mxu0
    %v263 = vadd.f32 0.0, %v262
    %v264 = vpop.f32.mrf.mxu0
    %265 = vmatprep.mubr.bf16.mxu0 0
    %266 = vmatmul.mubr.bf16.gmra.mxu0 %v121
    %v267 = vpop.f32.mrf.mxu0
    %v268 = vadd.f32 0.0, %v267
    %v269 = vpop.f32.mrf.mxu0
    %v270 = vpop.f32.mrf.mxu0
    %v271 = vadd.f32 0.0, %v270
    %v272 = vpop.f32.mrf.mxu0
    %273 = vmatprep.mubr.bf16.mxu0 0
    %274 = vmatmul.mubr.bf16.gmra.mxu0 %v124
    %v275 = vpop.f32.mrf.mxu0
    %v276 = vadd.f32 0.0, %v275
    %v277 = vpop.f32.mrf.mxu0
    %v278 = vpop.f32.mrf.mxu0
    %v279 = vadd.f32 0.0, %v278
    %v280 = vpop.f32.mrf.mxu0
    %281 = vmatprep.mubr.bf16.mxu0 0
    %282 = vmatmul.mubr.bf16.gmra.mxu0 %v127
    %v283 = vpop.f32.mrf.mxu0
    %v284 = vadd.f32 0.0, %v283
    %v285 = vpop.f32.mrf.mxu0
    %v286 = vpop.f32.mrf.mxu0
    %v287 = vadd.f32 0.0, %v286
    %v288 = vpop.f32.mrf.mxu0
    %289 = vdwg.mxu0
    %v290 = vpack.c.bf16 %v167, %v164
    %v291 = vpack.c.bf16 %v175, %v172
    %v292 = vpack.c.bf16 %v183, %v180
    %v293 = vpack.c.bf16 %v191, %v188
    %v294 = vpack.c.bf16 %v199, %v196
    %v295 = vpack.c.bf16 %v207, %v204
    %v296 = vpack.c.bf16 %v215, %v212
    %v297 = vpack.c.bf16 %v223, %v220
    %v298 = vpack.c.bf16 %v231, %v228
    %v299 = vpack.c.bf16 %v239, %v236
    %v300 = vpack.c.bf16 %v247, %v244
    %v301 = vpack.c.bf16 %v255, %v252
    %v302 = vpack.c.bf16 %v263, %v260
    %v303 = vpack.c.bf16 %v271, %v268
    %v304 = vpack.c.bf16 %v279, %v276
    %v305 = vpack.c.bf16 %v287, %v284
    %v322 = vunpack.c.l.b16 %v290
    %v323 = vunpack.c.h.b16 %v290
    %v324 = vunpack.c.l.b16 %v291
    %v325 = vunpack.c.h.b16 %v291
    %v326 = vunpack.c.l.b16 %v292
    %v327 = vunpack.c.h.b16 %v292
    %v328 = vunpack.c.l.b16 %v293
    %v329 = vunpack.c.h.b16 %v293
    %v330 = vunpack.c.l.b16 %v294
    %v331 = vunpack.c.h.b16 %v294
    %v332 = vunpack.c.l.b16 %v295
    %v333 = vunpack.c.h.b16 %v295
    %v334 = vunpack.c.l.b16 %v296
    %v335 = vunpack.c.h.b16 %v296
    %v336 = vunpack.c.l.b16 %v297
    %v337 = vunpack.c.h.b16 %v297
    %v338 = vunpack.c.l.b16 %v298
    %v339 = vunpack.c.h.b16 %v298
    %v340 = vunpack.c.l.b16 %v299
    %v341 = vunpack.c.h.b16 %v299
    %v342 = vunpack.c.l.b16 %v300
    %v343 = vunpack.c.h.b16 %v300
    %v344 = vunpack.c.l.b16 %v301
    %v345 = vunpack.c.h.b16 %v301
    %v346 = vunpack.c.l.b16 %v302
    %v347 = vunpack.c.h.b16 %v302
    %v348 = vunpack.c.l.b16 %v303
    %v349 = vunpack.c.h.b16 %v303
    %v350 = vunpack.c.l.b16 %v304
    %v351 = vunpack.c.h.b16 %v304
    %v352 = vunpack.c.l.b16 %v305
    %v353 = vunpack.c.h.b16 %v305
    %v354 = vpack.c.b16 %v322, %v322
    %v355 = vpack.c.b16 %v323, %v323
    %v356 = vpack.c.b16 %v324, %v324
    %v357 = vpack.c.b16 %v325, %v325
    %v358 = vpack.c.b16 %v326, %v326
    %v359 = vpack.c.b16 %v327, %v327
    %v360 = vpack.c.b16 %v328, %v328
    %v361 = vpack.c.b16 %v329, %v329
    %v362 = vpack.c.b16 %v330, %v330
    %v363 = vpack.c.b16 %v331, %v331
    %v364 = vpack.c.b16 %v332, %v332
    %v365 = vpack.c.b16 %v333, %v333
    %v366 = vpack.c.b16 %v334, %v334
    %v367 = vpack.c.b16 %v335, %v335
    %v368 = vpack.c.b16 %v336, %v336
    %v369 = vpack.c.b16 %v337, %v337
    %v370 = vpack.c.b16 %v338, %v338
    %v371 = vpack.c.b16 %v339, %v339
    %v372 = vpack.c.b16 %v340, %v340
    %v373 = vpack.c.b16 %v341, %v341
    %v374 = vpack.c.b16 %v342, %v342
    %v375 = vpack.c.b16 %v343, %v343
    %v376 = vpack.c.b16 %v344, %v344
    %v377 = vpack.c.b16 %v345, %v345
    %v378 = vpack.c.b16 %v346, %v346
    %v379 = vpack.c.b16 %v347, %v347
    %v380 = vpack.c.b16 %v348, %v348
    %v381 = vpack.c.b16 %v349, %v349
    %v382 = vpack.c.b16 %v350, %v350
    %v383 = vpack.c.b16 %v351, %v351
    %v384 = vpack.c.b16 %v352, %v352
    %v385 = vpack.c.b16 %v353, %v353
    %418 = vst [vmem:[#allocation2] sm:$0xf] %v354
    %419 = vst [vmem:[#allocation2 + $0x4] sm:$0xf] %v355
    %420 = vst [vmem:[#allocation2 + $0x8] sm:$0xf] %v356
    %421 = vst [vmem:[#allocation2 + $0xc] sm:$0xf] %v357
    %422 = vst [vmem:[#allocation2 + $0x10] sm:$0xf] %v358
    %423 = vst [vmem:[#allocation2 + $0x14] sm:$0xf] %v359
    %424 = vst [vmem:[#allocation2 + $0x18] sm:$0xf] %v360
    %425 = vst [vmem:[#allocation2 + $0x1c] sm:$0xf] %v361
    %426 = vst [vmem:[#allocation2 + $0x20] sm:$0xf] %v362
    %427 = vst [vmem:[#allocation2 + $0x24] sm:$0xf] %v363
    %428 = vst [vmem:[#allocation2 + $0x28] sm:$0xf] %v364
    %429 = vst [vmem:[#allocation2 + $0x2c] sm:$0xf] %v365
    %430 = vst [vmem:[#allocation2 + $0x30] sm:$0xf] %v366
    %431 = vst [vmem:[#allocation2 + $0x34] sm:$0xf] %v367
    %432 = vst [vmem:[#allocation2 + $0x38] sm:$0xf] %v368
    %433 = vst [vmem:[#allocation2 + $0x3c] sm:$0xf] %v369
    %434 = vst [vmem:[#allocation2 + $0x40] sm:$0xf] %v370
    %435 = vst [vmem:[#allocation2 + $0x44] sm:$0xf] %v371
    %436 = vst [vmem:[#allocation2 + $0x48] sm:$0xf] %v372
    %437 = vst [vmem:[#allocation2 + $0x4c] sm:$0xf] %v373
    %438 = vst [vmem:[#allocation2 + $0x50] sm:$0xf] %v374
    %439 = vst [vmem:[#allocation2 + $0x54] sm:$0xf] %v375
    %440 = vst [vmem:[#allocation2 + $0x58] sm:$0xf] %v376
    %441 = vst [vmem:[#allocation2 + $0x5c] sm:$0xf] %v377
    %442 = vst [vmem:[#allocation2 + $0x60] sm:$0xf] %v378
    %443 = vst [vmem:[#allocation2 + $0x64] sm:$0xf] %v379
    %444 = vst [vmem:[#allocation2 + $0x68] sm:$0xf] %v380
    %445 = vst [vmem:[#allocation2 + $0x6c] sm:$0xf] %v381
    %446 = vst [vmem:[#allocation2 + $0x70] sm:$0xf] %v382
    %447 = vst [vmem:[#allocation2 + $0x74] sm:$0xf] %v383
    %448 = vst [vmem:[#allocation2 + $0x78] sm:$0xf] %v384
    %449 = vst [vmem:[#allocation2 + $0x7c] sm:$0xf] %v385
    %v450 = vld [vmem:[%s2] sm:$0xff]
    %v451 = vld [vmem:[%s2 + $0x8] sm:$0xff]
    %v452 = vld [vmem:[%s2 + $0x10] sm:$0xff]
    %v453 = vld [vmem:[%s2 + $0x18] sm:$0xff]
    %v454 = vld [vmem:[%s2 + $0x20] sm:$0xff]
    %v455 = vld [vmem:[%s2 + $0x28] sm:$0xff]
    %v456 = vld [vmem:[%s2 + $0x30] sm:$0xff]
    %v457 = vld [vmem:[%s2 + $0x38] sm:$0xff]
    %v458 = vld [vmem:[%s2 + $0x40] sm:$0xff]
    %v459 = vld [vmem:[%s2 + $0x48] sm:$0xff]
    %v460 = vld [vmem:[%s2 + $0x50] sm:$0xff]
    %v461 = vld [vmem:[%s2 + $0x58] sm:$0xff]
    %v462 = vld [vmem:[%s2 + $0x60] sm:$0xff]
    %v463 = vld [vmem:[%s2 + $0x68] sm:$0xff]
    %v464 = vld [vmem:[%s2 + $0x70] sm:$0xff]
    %v465 = vld [vmem:[%s2 + $0x78] sm:$0xff]
    %v466 = vpack.c.bf16 %v451, %v450
    %v467 = vpack.c.bf16 %v453, %v452
    %v468 = vpack.c.bf16 %v455, %v454
    %v469 = vpack.c.bf16 %v457, %v456
    %v470 = vpack.c.bf16 %v459, %v458
    %v471 = vpack.c.bf16 %v461, %v460
    %v472 = vpack.c.bf16 %v463, %v462
    %v473 = vpack.c.bf16 %v465, %v464
    %474 = vmatprep.subr.bf16.mxu0 0
    %475 = vmatpush1.bf16.msra.mxu0 %v473
    %476 = vmatprep.subr.bf16.mxu0 0
    %477 = vmatpush1.bf16.msra.mxu0 %v472
    %478 = vmatprep.subr.bf16.mxu0 0
    %479 = vmatpush1.bf16.msra.mxu0 %v471
    %480 = vmatprep.subr.bf16.mxu0 0
    %481 = vmatpush1.bf16.msra.mxu0 %v470
    %482 = vmatprep.subr.bf16.mxu0 0
    %483 = vmatpush1.bf16.msra.mxu0 %v469
    %484 = vmatprep.subr.bf16.mxu0 0
    %485 = vmatpush1.bf16.msra.mxu0 %v468
    %486 = vmatprep.subr.bf16.mxu0 0
    %487 = vmatpush1.bf16.msra.mxu0 %v467
    %488 = vmatprep.subr.bf16.mxu0 0
    %489 = vmatpush1.bf16.msra.mxu0 %v466
    %490 = vmatprep.subr.bf16.mxu0 0
    %491 = vmatpush2.bf16.msra.mxu0 0
    %492 = vmatprep.subr.bf16.mxu0 0
    %493 = vmatpush2.bf16.msra.mxu0 0
    %494 = vmatprep.subr.bf16.mxu0 0
    %495 = vmatpush2.bf16.msra.mxu0 0
    %496 = vmatprep.subr.bf16.mxu0 0
    %497 = vmatpush2.bf16.msra.mxu0 0
    %498 = vmatprep.subr.bf16.mxu0 0
    %499 = vmatpush2.bf16.msra.mxu0 0
    %500 = vmatprep.subr.bf16.mxu0 0
    %501 = vmatpush2.bf16.msra.mxu0 0
    %502 = vmatprep.subr.bf16.mxu0 0
    %503 = vmatpush2.bf16.msra.mxu0 0
    %504 = vmatprep.subr.bf16.mxu0 0
    %505 = vmatpush2.bf16.msra.mxu0 0
    %506 = vmatprep.mubr.bf16.mxu0 0
    %507 = vmatmul.mubr.bf16.gmra.mxu0 %v290
    %v508 = vpop.f32.mrf.mxu0
    %v509 = vadd.f32 0.0, %v508
    %v510 = vpop.f32.mrf.mxu0
    %v511 = vpop.f32.mrf.mxu0
    %v512 = vadd.f32 0.0, %v511
    %v513 = vpop.f32.mrf.mxu0
    %514 = vmatprep.mubr.bf16.mxu0 0
    %515 = vmatmul.mubr.bf16.gmra.mxu0 %v291
    %v516 = vpop.f32.mrf.mxu0
    %v517 = vadd.f32 0.0, %v516
    %v518 = vpop.f32.mrf.mxu0
    %v519 = vpop.f32.mrf.mxu0
    %v520 = vadd.f32 0.0, %v519
    %v521 = vpop.f32.mrf.mxu0
    %522 = vmatprep.mubr.bf16.mxu0 0
    %523 = vmatmul.mubr.bf16.gmra.mxu0 %v292
    %v524 = vpop.f32.mrf.mxu0
    %v525 = vadd.f32 0.0, %v524
    %v526 = vpop.f32.mrf.mxu0
    %v527 = vpop.f32.mrf.mxu0
    %v528 = vadd.f32 0.0, %v527
    %v529 = vpop.f32.mrf.mxu0
    %530 = vmatprep.mubr.bf16.mxu0 0
    %531 = vmatmul.mubr.bf16.gmra.mxu0 %v293
    %v532 = vpop.f32.mrf.mxu0
    %v533 = vadd.f32 0.0, %v532
    %v534 = vpop.f32.mrf.mxu0
    %v535 = vpop.f32.mrf.mxu0
    %v536 = vadd.f32 0.0, %v535
    %v537 = vpop.f32.mrf.mxu0
    %538 = vmatprep.mubr.bf16.mxu0 0
    %539 = vmatmul.mubr.bf16.gmra.mxu0 %v294
    %v540 = vpop.f32.mrf.mxu0
    %v541 = vadd.f32 0.0, %v540
    %v542 = vpop.f32.mrf.mxu0
    %v543 = vpop.f32.mrf.mxu0
    %v544 = vadd.f32 0.0, %v543
    %v545 = vpop.f32.mrf.mxu0
    %546 = vmatprep.mubr.bf16.mxu0 0
    %547 = vmatmul.mubr.bf16.gmra.mxu0 %v295
    %v548 = vpop.f32.mrf.mxu0
    %v549 = vadd.f32 0.0, %v548
    %v550 = vpop.f32.mrf.mxu0
    %v551 = vpop.f32.mrf.mxu0
    %v552 = vadd.f32 0.0, %v551
    %v553 = vpop.f32.mrf.mxu0
    %554 = vmatprep.mubr.bf16.mxu0 0
    %555 = vmatmul.mubr.bf16.gmra.mxu0 %v296
    %v556 = vpop.f32.mrf.mxu0
    %v557 = vadd.f32 0.0, %v556
    %v558 = vpop.f32.mrf.mxu0
    %v559 = vpop.f32.mrf.mxu0
    %v560 = vadd.f32 0.0, %v559
    %v561 = vpop.f32.mrf.mxu0
    %562 = vmatprep.mubr.bf16.mxu0 0
    %563 = vmatmul.mubr.bf16.gmra.mxu0 %v297
    %v564 = vpop.f32.mrf.mxu0
    %v565 = vadd.f32 0.0, %v564
    %v566 = vpop.f32.mrf.mxu0
    %v567 = vpop.f32.mrf.mxu0
    %v568 = vadd.f32 0.0, %v567
    %v569 = vpop.f32.mrf.mxu0
    %570 = vmatprep.mubr.bf16.mxu0 0
    %571 = vmatmul.mubr.bf16.gmra.mxu0 %v298
    %v572 = vpop.f32.mrf.mxu0
    %v573 = vadd.f32 0.0, %v572
    %v574 = vpop.f32.mrf.mxu0
    %v575 = vpop.f32.mrf.mxu0
    %v576 = vadd.f32 0.0, %v575
    %v577 = vpop.f32.mrf.mxu0
    %578 = vmatprep.mubr.bf16.mxu0 0
    %579 = vmatmul.mubr.bf16.gmra.mxu0 %v299
    %v580 = vpop.f32.mrf.mxu0
    %v581 = vadd.f32 0.0, %v580
    %v582 = vpop.f32.mrf.mxu0
    %v583 = vpop.f32.mrf.mxu0
    %v584 = vadd.f32 0.0, %v583
    %v585 = vpop.f32.mrf.mxu0
    %586 = vmatprep.mubr.bf16.mxu0 0
    %587 = vmatmul.mubr.bf16.gmra.mxu0 %v300
    %v588 = vpop.f32.mrf.mxu0
    %v589 = vadd.f32 0.0, %v588
    %v590 = vpop.f32.mrf.mxu0
    %v591 = vpop.f32.mrf.mxu0
    %v592 = vadd.f32 0.0, %v591
    %v593 = vpop.f32.mrf.mxu0
    %594 = vmatprep.mubr.bf16.mxu0 0
    %595 = vmatmul.mubr.bf16.gmra.mxu0 %v301
    %v596 = vpop.f32.mrf.mxu0
    %v597 = vadd.f32 0.0, %v596
    %v598 = vpop.f32.mrf.mxu0
    %v599 = vpop.f32.mrf.mxu0
    %v600 = vadd.f32 0.0, %v599
    %v601 = vpop.f32.mrf.mxu0
    %602 = vmatprep.mubr.bf16.mxu0 0
    %603 = vmatmul.mubr.bf16.gmra.mxu0 %v302
    %v604 = vpop.f32.mrf.mxu0
    %v605 = vadd.f32 0.0, %v604
    %v606 = vpop.f32.mrf.mxu0
    %v607 = vpop.f32.mrf.mxu0
    %v608 = vadd.f32 0.0, %v607
    %v609 = vpop.f32.mrf.mxu0
    %610 = vmatprep.mubr.bf16.mxu0 0
    %611 = vmatmul.mubr.bf16.gmra.mxu0 %v303
    %v612 = vpop.f32.mrf.mxu0
    %v613 = vadd.f32 0.0, %v612
    %v614 = vpop.f32.mrf.mxu0
    %v615 = vpop.f32.mrf.mxu0
    %v616 = vadd.f32 0.0, %v615
    %v617 = vpop.f32.mrf.mxu0
    %618 = vmatprep.mubr.bf16.mxu0 0
    %619 = vmatmul.mubr.bf16.gmra.mxu0 %v304
    %v620 = vpop.f32.mrf.mxu0
    %v621 = vadd.f32 0.0, %v620
    %v622 = vpop.f32.mrf.mxu0
    %v623 = vpop.f32.mrf.mxu0
    %v624 = vadd.f32 0.0, %v623
    %v625 = vpop.f32.mrf.mxu0
    %626 = vmatprep.mubr.bf16.mxu0 0
    %627 = vmatmul.mubr.bf16.gmra.mxu0 %v305
    %v628 = vpop.f32.mrf.mxu0
    %v629 = vadd.f32 0.0, %v628
    %v630 = vpop.f32.mrf.mxu0
    %v631 = vpop.f32.mrf.mxu0
    %v632 = vadd.f32 0.0, %v631
    %v633 = vpop.f32.mrf.mxu0
    %634 = vdwg.mxu0
    %vm635 = vcmask 7168
    %636 = vst.msk [vmem:[%s4] sm:$0xff] %vm635, %v509
    %637 = vst.msk [vmem:[%s4 + $0x8] sm:$0xff] %vm635, %v512
    %638 = vst.msk [vmem:[%s4 + $0x10] sm:$0xff] %vm635, %v517
    %639 = vst.msk [vmem:[%s4 + $0x18] sm:$0xff] %vm635, %v520
    %640 = vst.msk [vmem:[%s4 + $0x20] sm:$0xff] %vm635, %v525
    %641 = vst.msk [vmem:[%s4 + $0x28] sm:$0xff] %vm635, %v528
    %642 = vst.msk [vmem:[%s4 + $0x30] sm:$0xff] %vm635, %v533
    %643 = vst.msk [vmem:[%s4 + $0x38] sm:$0xff] %vm635, %v536
    %644 = vst.msk [vmem:[%s4 + $0x40] sm:$0xff] %vm635, %v541
    %645 = vst.msk [vmem:[%s4 + $0x48] sm:$0xff] %vm635, %v544
    %646 = vst.msk [vmem:[%s4 + $0x50] sm:$0xff] %vm635, %v549
    %647 = vst.msk [vmem:[%s4 + $0x58] sm:$0xff] %vm635, %v552
    %648 = vst.msk [vmem:[%s4 + $0x60] sm:$0xff] %vm635, %v557
    %649 = vst.msk [vmem:[%s4 + $0x68] sm:$0xff] %vm635, %v560
    %650 = vst.msk [vmem:[%s4 + $0x70] sm:$0xff] %vm635, %v565
    %651 = vst.msk [vmem:[%s4 + $0x78] sm:$0xff] %vm635, %v568
    %652 = vst.msk [vmem:[%s4 + $0x80] sm:$0xff] %vm635, %v573
    %653 = vst.msk [vmem:[%s4 + $0x88] sm:$0xff] %vm635, %v576
    %654 = vst.msk [vmem:[%s4 + $0x90] sm:$0xff] %vm635, %v581
    %655 = vst.msk [vmem:[%s4 + $0x98] sm:$0xff] %vm635, %v584
    %656 = vst.msk [vmem:[%s4 + $0xa0] sm:$0xff] %vm635, %v589
    %657 = vst.msk [vmem:[%s4 + $0xa8] sm:$0xff] %vm635, %v592
    %658 = vst.msk [vmem:[%s4 + $0xb0] sm:$0xff] %vm635, %v597
    %659 = vst.msk [vmem:[%s4 + $0xb8] sm:$0xff] %vm635, %v600
    %660 = vst.msk [vmem:[%s4 + $0xc0] sm:$0xff] %vm635, %v605
    %661 = vst.msk [vmem:[%s4 + $0xc8] sm:$0xff] %vm635, %v608
    %662 = vst.msk [vmem:[%s4 + $0xd0] sm:$0xff] %vm635, %v613
    %663 = vst.msk [vmem:[%s4 + $0xd8] sm:$0xff] %vm635, %v616
    %664 = vst.msk [vmem:[%s4 + $0xe0] sm:$0xff] %vm635, %v621
    %665 = vst.msk [vmem:[%s4 + $0xe8] sm:$0xff] %vm635, %v624
    %666 = vst.msk [vmem:[%s4 + $0xf0] sm:$0xff] %vm635, %v629
    %667 = vst.msk [vmem:[%s4 + $0xf8] sm:$0xff] %vm635, %v632
    %668 = vxpose.xlu0.b32.start [1/16] %v509, 128
    %669 = vxpose.xlu0.b32.cont [2/16] %v512, 128
    %670 = vxpose.xlu0.b32.cont [3/16] %v517, 128
    %671 = vxpose.xlu0.b32.cont [4/16] %v520, 128
    %672 = vxpose.xlu0.b32.cont [5/16] %v525, 128
    %673 = vxpose.xlu0.b32.cont [6/16] %v528, 128
    %674 = vxpose.xlu0.b32.cont [7/16] %v533, 128
    %675 = vxpose.xlu0.b32.cont [8/16] %v536, 128
    %676 = vxpose.xlu0.b32.cont [9/16] %v541, 128
    %677 = vxpose.xlu0.b32.cont [10/16] %v544, 128
    %678 = vxpose.xlu0.b32.cont [11/16] %v549, 128
    %679 = vxpose.xlu0.b32.cont [12/16] %v552, 128
    %680 = vxpose.xlu0.b32.cont [13/16] %v557, 128
    %681 = vxpose.xlu0.b32.cont [14/16] %v560, 128
    %682 = vxpose.xlu0.b32.cont [15/16] %v565, 128
    %683 = vxpose.xlu0.b32.end [16/16] %v568, 128
    %v684 = vpop.trf.xlu0
    %v685 = vpop.trf.xlu0
    %v686 = vpop.trf.xlu0
    %v687 = vpop.trf.xlu0
    %v688 = vpop.trf.xlu0
    %v689 = vpop.trf.xlu0
    %v690 = vpop.trf.xlu0
    %v691 = vpop.trf.xlu0
    %v692 = vpop.trf.xlu0
    %v693 = vpop.trf.xlu0
    %v694 = vpop.trf.xlu0
    %v695 = vpop.trf.xlu0
    %v696 = vpop.trf.xlu0
    %v697 = vpop.trf.xlu0
    %v698 = vpop.trf.xlu0
    %v699 = vpop.trf.xlu0
    %700 = vxpose.xlu0.b32.start [1/16] %v573, 128
    %701 = vxpose.xlu0.b32.cont [2/16] %v576, 128
    %702 = vxpose.xlu0.b32.cont [3/16] %v581, 128
    %703 = vxpose.xlu0.b32.cont [4/16] %v584, 128
    %704 = vxpose.xlu0.b32.cont [5/16] %v589, 128
    %705 = vxpose.xlu0.b32.cont [6/16] %v592, 128
    %706 = vxpose.xlu0.b32.cont [7/16] %v597, 128
    %707 = vxpose.xlu0.b32.cont [8/16] %v600, 128
    %708 = vxpose.xlu0.b32.cont [9/16] %v605, 128
    %709 = vxpose.xlu0.b32.cont [10/16] %v608, 128
    %710 = vxpose.xlu0.b32.cont [11/16] %v613, 128
    %711 = vxpose.xlu0.b32.cont [12/16] %v616, 128
    %712 = vxpose.xlu0.b32.cont [13/16] %v621, 128
    %713 = vxpose.xlu0.b32.cont [14/16] %v624, 128
    %714 = vxpose.xlu0.b32.cont [15/16] %v629, 128
    %715 = vxpose.xlu0.b32.end [16/16] %v632, 128
    %v716 = vpop.trf.xlu0
    %v717 = vpop.trf.xlu0
    %v718 = vpop.trf.xlu0
    %v719 = vpop.trf.xlu0
    %v720 = vpop.trf.xlu0
    %v721 = vpop.trf.xlu0
    %v722 = vpop.trf.xlu0
    %v723 = vpop.trf.xlu0
    %v724 = vpop.trf.xlu0
    %v725 = vpop.trf.xlu0
    %v726 = vpop.trf.xlu0
    %v727 = vpop.trf.xlu0
    %v728 = vpop.trf.xlu0
    %v729 = vpop.trf.xlu0
    %v730 = vpop.trf.xlu0
    %v731 = vpop.trf.xlu0
    %v734 = vcombine.low %v684, %v716
    %v736 = vunpack.c.l.s4 1966171168
    %v737 = vunpack.c.0.s8 %v736
    %v738 = vlaneseq
    %v739 = vshrl.u32 %v738, 7
    %v740 = vsub.s32 %v737, %v739
    %v741 = vrot.slane %v734, %v740
    %v742 = vcombine.high %v741, %v741
    %v744 = vunpack.c.l.s4 1966171168
    %v745 = vunpack.c.0.s8 %v744
    %v746 = vlaneseq
    %v747 = vshrl.u32 %v746, 7
    %v748 = vsub.s32 %v745, %v747
    %v749 = vrot.slane %v742, %v748
    %v751 = vlaneseq
    %vm752 = vcmp.ge.s32.totalorder %v751, 0
    %vm753 = vcmp.lt.s32.totalorder %v751, 256
    %vm754 = vmand %vm752, %vm753
    %755 = vst.msk [vmem:[#allocation4] sm:$0x3] %vm754, %v749
    // Predicated region
    $region14: #{tpu_custom_call.1} parent=1 // pred_check
      _
    $region15: #{tpu_custom_call.1} parent=1 // pred_check_branch
      %757 = sbr.rel (0) target = $region17
    $region16: #{tpu_custom_call.1} parent=1 // pred_region
      %s759 = ssub.s32 2048, 2048
      %760 = vsyncadd [#allocation3], %s759
      %s761 = sshll.u32 [#allocation2], 4
      %s762 = int_to_ptr.vmem [resolvable:$true] %s761
      %767 = dma.vmem_to_hbm [thread:$0]  %s762, 2048, %s3, [#allocation3], 64, 64, 4
    $region17: #{tpu_custom_call.1} parent=1 // pred_fallthru
      _
    // Predicated region
    $region18: #{tpu_custom_call.1} parent=1 // pred_check
      _
    $region19: #{tpu_custom_call.1} parent=1 // pred_check_branch
      %769 = sbr.rel (0) target = $region21
    $region20: #{tpu_custom_call.1} parent=1 // pred_region
      _
    $region21: #{tpu_custom_call.1} parent=1 // pred_fallthru
      _
    // Predicated region
    $region22: #{tpu_custom_call.1} parent=1 // pred_check
      _
    $region23: #{tpu_custom_call.1} parent=1 // pred_check_branch
      %771 = sbr.rel (0) target = $region25
    $region24: #{tpu_custom_call.1} parent=1 // pred_region
      %s773 = ssub.s32 32, 32
      %774 = vsyncadd [#allocation5], %s773
      %s776 = sshll.u32 [#allocation4], 4
      %s777 = int_to_ptr.vmem [resolvable:$true] %s776
      %779 = dma.vmem_to_hbm [thread:$0]  %s777, 32, %s5, [#allocation5]
    $region25: #{tpu_custom_call.1} parent=1 // pred_fallthru
      _
    // Predicated region
    $region26: #{tpu_custom_call.1} parent=1 // pred_check
      _
    $region27: #{tpu_custom_call.1} parent=1 // pred_check_branch
      %781 = sbr.rel (0) target = $region29
    $region28: #{tpu_custom_call.1} parent=1 // pred_region
      %782 = dma.done [#allocation3], 2048
    $region29: #{tpu_custom_call.1} parent=1 // pred_fallthru
      _
    // Predicated region
    $region30: #{tpu_custom_call.1} parent=1 // pred_check
      _
    $region31: #{tpu_custom_call.1} parent=1 // pred_check_branch
      %784 = sbr.rel (0) target = $region33
    $region32: #{tpu_custom_call.1} parent=1 // pred_region
      _
    $region33: #{tpu_custom_call.1} parent=1 // pred_fallthru
      _
    // Predicated region
    $region34: #{tpu_custom_call.1} parent=1 // pred_check
      _
    $region35: #{tpu_custom_call.1} parent=1 // pred_check_branch
      %786 = sbr.rel (0) target = $region37
    $region36: #{tpu_custom_call.1} parent=1 // pred_region
      %787 = dma.done [#allocation5], 32
    $region37: #{tpu_custom_call.1} parent=1 // pred_fallthru
      _
    %788 = vsyncpa [#allocation3], 1
    %789 = vsyncpa [#allocation5], 1

</llo_original>
